<compile_context>
chip_gen: v7x
topology: tpu7x:2x2x1
jax: 0.10.0
libtpu: 0.0.40
codegen_flags: <defaults>
</compile_context>

<pallas_src>
import numpy as np
import jax
import jax.numpy as jnp
from jax.experimental import pallas as pl
from jax.experimental.pallas import tpu as pltpu

# ---- SMPLifyCameraLoss registered buffer (static index set) ----------------
INIT_JOINTS_IDXS = (2, 5, 9, 12, 16, 17)

# ---- default synthetic pinhole camera / weights (runtime-overridable) -------
DATA_WEIGHT = 1.0
CAM_FOCAL = 500.0
CAM_CX, CAM_CY = 128.0, 128.0
CAM_TX, CAM_TY, CAM_TZ = 0.0, 0.0, 5.0


def camera_loss_kernel(params_ref, slab_ref, out_ref):
    # params (SMEM, f32[8]): [data_weight, focal, cx, cy, tx, ty, tz, pad]
    data_weight = params_ref[0]
    focal = params_ref[1]
    cx = params_ref[2]
    cy = params_ref[3]
    tx = params_ref[4]
    ty = params_ref[5]
    tz = params_ref[6]

    # slab (VMEM, f32[6, B*J]): [pred_x, pred_y, pred_z, gt_u, gt_v, mask]
    slab = slab_ref[...]
    px = slab[0:1, :]
    py = slab[1:2, :]
    pz = slab[2:3, :]
    gu = slab[3:4, :]
    gv = slab[4:5, :]
    mask = slab[5:6, :]

    # ---- perspective camera projection (exact divide) ----------------------
    inv_z = 1.0 / (pz + tz)
    u = focal * (px + tx) * inv_z + cx
    v = focal * (py + ty) * inv_z + cy

    du = gu - u
    dv = gv - v

    # ---- masked sum == index_select + sum; single cross-lane reduction -----
    loss = jnp.sum(mask * (du * du + dv * dv)) * (data_weight * data_weight)
    out_ref[0, 0] = loss


def smplify_camera_loss(joints3d, gt_joints_2d, data_weight=DATA_WEIGHT,
                        focal=CAM_FOCAL, cx=CAM_CX, cy=CAM_CY,
                        tx=CAM_TX, ty=CAM_TY, tz=CAM_TZ):
    """joints3d: (B, J, 3) model joints; gt_joints_2d: (B, J, 2)."""
    f32 = jnp.float32
    B, J, _ = joints3d.shape
    N = B * J

    # Runtime scalars -> SMEM (no retrace when the fitting loop changes them).
    params = jnp.stack([jnp.asarray(x, f32) for x in
                        (data_weight, focal, cx, cy, tx, ty, tz, 0.0)])

    # init_joints_idxs as a baked numpy constant mask over the flattened axis.
    mask_j = np.zeros((J,), np.float32)
    mask_j[list(INIT_JOINTS_IDXS)] = 1.0
    mask_row = jnp.asarray(np.tile(mask_j, B)).reshape(1, N)

    # Lane-dense (6, B*J) slab: components on sublanes, B*J on lanes.
    pred = joints3d.reshape(N, 3).T.astype(f32)        # (3, N)
    gt = gt_joints_2d.reshape(N, 2).T.astype(f32)       # (2, N)
    slab = jnp.concatenate([pred, gt, mask_row], axis=0)  # (6, N)

    cost = pl.CostEstimate(
        flops=15 * N,
        transcendentals=N,                       # the per-joint divide
        bytes_accessed=6 * N * 4 + 8 * 4 + 4,
    )

    out = pl.pallas_call(
        camera_loss_kernel,
        out_shape=jax.ShapeDtypeStruct((1, 1), jnp.float32),
        in_specs=[
            pl.BlockSpec(memory_space=pltpu.MemorySpace.SMEM),   # params
            pl.BlockSpec(memory_space=pltpu.MemorySpace.VMEM),   # slab
        ],
        out_specs=pl.BlockSpec(memory_space=pltpu.MemorySpace.SMEM),
        compiler_params=pltpu.CompilerParams(
            # Let XLA fuse the slab packing (transpose/concat) into the
            # pallas_call operand instead of a separate HBM round-trip.
            allow_input_fusion=[False, True]),
        cost_estimate=cost,
    )(params, slab)
    return out[0, 0]


def smplify_camera_loss_reference(joints3d, gt_joints_2d,
                                  data_weight=DATA_WEIGHT,
                                  focal=CAM_FOCAL, cx=CAM_CX, cy=CAM_CY,
                                  tx=CAM_TX, ty=CAM_TY, tz=CAM_TZ):
    """Pure-JAX mirror of the PyTorch forward (same pinhole camera)."""
    cam = joints3d + jnp.array([tx, ty, tz], jnp.float32)
    projected = (focal * cam[..., :2] / cam[..., 2:3]
                 + jnp.array([cx, cy], jnp.float32))
    idxs = jnp.array(INIT_JOINTS_IDXS, jnp.int32)
    err = (jnp.take(gt_joints_2d, idxs, axis=1)
           - jnp.take(projected, idxs, axis=1)) ** 2
    return jnp.sum(err) * (jnp.float32(data_weight) ** 2)


if __name__ == "__main__":
    key = jax.random.PRNGKey(0)
    B, J = 2, 24
    k1, k2 = jax.random.split(key, 2)

    joints3d = jax.random.normal(k1, (B, J, 3), jnp.float32) * 0.5
    gt_joints_2d = jax.random.normal(k2, (B, J, 2), jnp.float32) * 20.0 + 128.0

    # Exercise the runtime (non-retracing) parameters with non-default values.
    kwargs = dict(data_weight=1.5, focal=480.0, cx=120.0, cy=130.0,
                  tx=0.05, ty=-0.02, tz=5.5)

    out = jax.block_until_ready(
        smplify_camera_loss(joints3d, gt_joints_2d, **kwargs))
    ref = jax.block_until_ready(
        smplify_camera_loss_reference(joints3d, gt_joints_2d, **kwargs))

    np.testing.assert_allclose(np.asarray(out), np.asarray(ref),
                               rtol=1e-4, atol=1e-2)
    assert np.isfinite(np.asarray(out))
    print("KERNEL_OK")
</pallas_src>

<mosaic_0001>
module attributes {stable_mosaic.version = 11 : i64} {
  func.func @camera_loss_kernel(%arg0: memref<8xf32, #tpu.memory_space<smem>>, %arg1: memref<6x48xf32, #tpu.memory_space<vmem>>, %arg2: memref<1x1xf32, #tpu.memory_space<smem>>) attributes {dimension_semantics = [], scalar_prefetch = 0 : i64, scratch_operands = 0 : i64, tpu.core_type = #tpu.core_type<tc>} {
    %c0 = arith.constant 0 : index
    %0 = memref.load %arg0[%c0] : memref<8xf32, #tpu.memory_space<smem>>
    %c1 = arith.constant 1 : index
    %1 = memref.load %arg0[%c1] : memref<8xf32, #tpu.memory_space<smem>>
    %c2 = arith.constant 2 : index
    %2 = memref.load %arg0[%c2] : memref<8xf32, #tpu.memory_space<smem>>
    %c3 = arith.constant 3 : index
    %3 = memref.load %arg0[%c3] : memref<8xf32, #tpu.memory_space<smem>>
    %c4 = arith.constant 4 : index
    %4 = memref.load %arg0[%c4] : memref<8xf32, #tpu.memory_space<smem>>
    %c5 = arith.constant 5 : index
    %5 = memref.load %arg0[%c5] : memref<8xf32, #tpu.memory_space<smem>>
    %c6 = arith.constant 6 : index
    %6 = memref.load %arg0[%c6] : memref<8xf32, #tpu.memory_space<smem>>
    %c0_0 = arith.constant 0 : index
    %c0_1 = arith.constant 0 : index
    %7 = vector.load %arg1[%c0_0, %c0_1] : memref<6x48xf32, #tpu.memory_space<vmem>>, vector<6x48xf32>
    %8 = vector.extract_strided_slice %7 {offsets = [0, 0], sizes = [1, 48], strides = [1, 1]} : vector<6x48xf32> to vector<1x48xf32>
    %9 = vector.extract_strided_slice %7 {offsets = [1, 0], sizes = [1, 48], strides = [1, 1]} : vector<6x48xf32> to vector<1x48xf32>
    %10 = vector.extract_strided_slice %7 {offsets = [2, 0], sizes = [1, 48], strides = [1, 1]} : vector<6x48xf32> to vector<1x48xf32>
    %11 = vector.extract_strided_slice %7 {offsets = [3, 0], sizes = [1, 48], strides = [1, 1]} : vector<6x48xf32> to vector<1x48xf32>
    %12 = vector.extract_strided_slice %7 {offsets = [4, 0], sizes = [1, 48], strides = [1, 1]} : vector<6x48xf32> to vector<1x48xf32>
    %13 = vector.extract_strided_slice %7 {offsets = [5, 0], sizes = [1, 48], strides = [1, 1]} : vector<6x48xf32> to vector<1x48xf32>
    %14 = vector.broadcast %6 : f32 to vector<1x48xf32>
    %15 = arith.addf %10, %14 : vector<1x48xf32>
    %cst = arith.constant 1.000000e+00 : f32
    %16 = vector.broadcast %cst : f32 to vector<1x48xf32>
    %17 = arith.divf %16, %15 : vector<1x48xf32>
    %18 = vector.broadcast %4 : f32 to vector<1x48xf32>
    %19 = arith.addf %8, %18 : vector<1x48xf32>
    %20 = vector.broadcast %1 : f32 to vector<1x48xf32>
    %21 = arith.mulf %20, %19 : vector<1x48xf32>
    %22 = arith.mulf %21, %17 : vector<1x48xf32>
    %23 = vector.broadcast %2 : f32 to vector<1x48xf32>
    %24 = arith.addf %22, %23 : vector<1x48xf32>
    %25 = vector.broadcast %5 : f32 to vector<1x48xf32>
    %26 = arith.addf %9, %25 : vector<1x48xf32>
    %27 = vector.broadcast %1 : f32 to vector<1x48xf32>
    %28 = arith.mulf %27, %26 : vector<1x48xf32>
    %29 = arith.mulf %28, %17 : vector<1x48xf32>
    %30 = vector.broadcast %3 : f32 to vector<1x48xf32>
    %31 = arith.addf %29, %30 : vector<1x48xf32>
    %32 = arith.subf %11, %24 : vector<1x48xf32>
    %33 = arith.subf %12, %31 : vector<1x48xf32>
    %34 = arith.mulf %32, %32 : vector<1x48xf32>
    %35 = arith.mulf %33, %33 : vector<1x48xf32>
    %36 = arith.addf %34, %35 : vector<1x48xf32>
    %37 = arith.mulf %13, %36 : vector<1x48xf32>
    %38 = vector.shape_cast %37 : vector<1x48xf32> to vector<1x1x48xf32>
    %cst_2 = arith.constant dense<0.000000e+00> : vector<1xf32>
    %39 = vector.multi_reduction <add>, %38, %cst_2 [1, 2] : vector<1x1x48xf32> to vector<1xf32>
    %40 = vector.shape_cast %39 : vector<1xf32> to vector<1x1x1xf32>
    %41 = vector.extract %40[0, 0, 0] : f32 from vector<1x1x1xf32>
    %42 = arith.mulf %0, %0 : f32
    %43 = arith.mulf %41, %42 : f32
    %c0_3 = arith.constant 0 : index
    %c0_4 = arith.constant 0 : index
    %44 = memref.load %arg2[%c0_3, %c0_4] : memref<1x1xf32, #tpu.memory_space<smem>>
    memref.store %43, %arg2[%c0_3, %c0_4] : memref<1x1xf32, #tpu.memory_space<smem>>
    return
  }
}

</mosaic_0001>

<llo_original>
// kernel: tpu_custom_call.1
$region0: #{tpu_custom_call.1}
  #allocation0 [shape = 'u32[]', space=smem, size = 0x4, offset = 0x4, fixed_abs, tag = 'smem constant byte address 0x4 - core index']
  #allocation1 [shape = 'u32[144,128]{1,0:T(1,128)}', space=vmem, size = 0x12000, scoped, tag = 'internal scratch']
  %s0 = inlined_call_operand.hbm [shape: f32[8], index: 0, kind: input, shape index: {}]
  %s1 = inlined_call_operand.hbm [shape: f32[6,48], index: 1, kind: input, shape index: {}]
  %s2 = inlined_call_operand.hbm [shape: f32[1,1], index: 2, kind: output, shape index: {}]
  %s3 = sld [smem:[#allocation0]]
  $region26: #{tpu_custom_call.1} parent=0
    _
  %s5 = ssub.s32 1, %s3
  %s6 = scalar_select 0, %s5, %s3
  $region1: #{tpu_custom_call.1} parent=0
    #allocation2 [shape = 'u8[512]{0}', space=smem, size = 0x200, scoped, tag = 'input window, operand 0, single buffered']
    #allocation3 [shape = 's32[1]{0}', space=sflag, size = 0x4, scoped, tag = 'scoped memory for tpu_custom_call.1']
    #allocation4 [shape = 's32[1]{0}', space=sflag, size = 0x4, scoped, tag = 'scoped memory for tpu_custom_call.1']
    #allocation5 [shape = 's32[1]{0}', space=sflag, size = 0x4, scoped, tag = 'scoped memory for tpu_custom_call.1']
    #allocation6 [shape = 'u8[4096]{0}', space=vmem, size = 0x1000, scoped, tag = 'input window, operand 1, single buffered']
    #allocation7 [shape = 'u8[512]{0}', space=smem, size = 0x200, scoped, tag = 'output window, operand 0, single buffered']
    %7 = vsyncpa [#allocation4], 0
    %8 = vsyncpa [#allocation3], 0
    %9 = vsyncpa [#allocation5], 0
    // Predicated region
    $region2: #{tpu_custom_call.1} parent=1 // pred_check
      _
    $region3: #{tpu_custom_call.1} parent=1 // pred_check_branch
      %11 = sbr.rel (0) target = $region5
    $region4: #{tpu_custom_call.1} parent=1 // pred_region
      %s13 = ssub.s32 16, 16
      %14 = vsyncadd [#allocation4], %s13
      %17 = dma.hbm_to_smem %s0, 16, [#allocation2], [#allocation4]
    $region5: #{tpu_custom_call.1} parent=1 // pred_fallthru
      _
    // Predicated region
    $region6: #{tpu_custom_call.1} parent=1 // pred_check
      _
    $region7: #{tpu_custom_call.1} parent=1 // pred_check_branch
      %19 = sbr.rel (0) target = $region9
    $region8: #{tpu_custom_call.1} parent=1 // pred_region
      %s21 = ssub.s32 128, 128
      %22 = vsyncadd [#allocation3], %s21
      %s24 = sshll.u32 [#allocation6], 4
      %s25 = int_to_ptr.vmem [resolvable:$true] %s24
      %27 = dma.hbm_to_vmem [thread:$0]  %s1, 128, %s25, [#allocation3]
    $region9: #{tpu_custom_call.1} parent=1 // pred_fallthru
      _
    // Predicated region
    $region10: #{tpu_custom_call.1} parent=1 // pred_check
      _
    $region11: #{tpu_custom_call.1} parent=1 // pred_check_branch
      %29 = sbr.rel (0) target = $region13
    $region12: #{tpu_custom_call.1} parent=1 // pred_region
      %30 = dma.done [#allocation4], 16
    $region13: #{tpu_custom_call.1} parent=1 // pred_fallthru
      _
    // Predicated region
    $region14: #{tpu_custom_call.1} parent=1 // pred_check
      _
    $region15: #{tpu_custom_call.1} parent=1 // pred_check_branch
      %32 = sbr.rel (0) target = $region17
    $region16: #{tpu_custom_call.1} parent=1 // pred_region
      %33 = dma.done [#allocation3], 128
    $region17: #{tpu_custom_call.1} parent=1 // pred_fallthru
      _
    %34 = sfence
    %s35 = sld [smem:[#allocation2]]
    %s36 = sld [smem:[#allocation2 + $0x1]]
    %s37 = sld [smem:[#allocation2 + $0x2]]
    %s38 = sld [smem:[#allocation2 + $0x3]]
    %s39 = sld [smem:[#allocation2 + $0x4]]
    %s40 = sld [smem:[#allocation2 + $0x5]]
    %s41 = sld [smem:[#allocation2 + $0x6]]
    %v42 = vld [vmem:[#allocation6] sm:$0x3f]
    %v43 = vstv %s41
    %v44 = vadd.f32 %v42, %v43
    %v45 = vrcp.pop %v44
    %v46 = vmul.f32 1.0, %v45
    %v47 = vstv %s39
    %v48 = vadd.f32 %v42, %v47
    %v49 = vstv %s36
    %v50 = vmul.f32 %v49, %v48
    %v52 = vrot.slane %v46, 2
    %v54 = vmul.f32 %v50, %v52
    %v55 = vstv %s37
    %v56 = vadd.f32 %v54, %v55
    %v57 = vstv %s40
    %v58 = vadd.f32 %v42, %v57
    %v59 = vmul.f32 %v49, %v58
    %v60 = vrot.slane %v46, 1
    %v62 = vmul.f32 %v59, %v60
    %v63 = vstv %s38
    %v64 = vadd.f32 %v62, %v63
    %v66 = vrot.slane %v56, 5
    %v68 = vsub.f32 %v42, %v66
    %v70 = vrot.slane %v64, 5
    %v72 = vsub.f32 %v42, %v70
    %v73 = vmul.f32 %v68, %v68
    %v74 = vmul.f32 %v72, %v72
    %v76 = vrot.slane %v74, 1
    %v78 = vadd.f32 %v73, %v76
    %v80 = vrot.slane %v78, 6
    %v82 = vmul.f32 %v42, %v80
    %v84 = vrot.slane %v82, 5
    %vm86 = vcmask 385024
    %v87 = vsel %vm86, %v84, 0.0
    %88 = vadd.xlane.f32.xlu0 %v87
    %v89 = vpop.xlane.xlu0 %88
    %v90 = vrot.slane %v89, 4
    %v91 = vadd.f32 %v89, %v90
    %v92 = vrot.slane %v91, 2
    %v93 = vadd.f32 %v91, %v92
    %v94 = vrot.slane %v93, 1
    %v95 = vadd.f32 %v93, %v94
    %s96 = vtos %v95
    %s97 = smul.f32 %s35, %s35
    %s98 = smul.f32 %s96, %s97
    %s99 = scalar_lea.smem [#allocation7], 0
    %100 = sst [smem:[%s99]] %s98
    // Predicated region
    $region18: #{tpu_custom_call.1} parent=1 // pred_check
      _
    $region19: #{tpu_custom_call.1} parent=1 // pred_check_branch
      %102 = sbr.rel (0) target = $region21
    $region20: #{tpu_custom_call.1} parent=1 // pred_region
      %s104 = ssub.s32 16, 16
      %105 = vsyncadd [#allocation5], %s104
      %108 = dma.smem_to_hbm [#allocation7], 16, %s2, [#allocation5]
    $region21: #{tpu_custom_call.1} parent=1 // pred_fallthru
      _
    // Predicated region
    $region22: #{tpu_custom_call.1} parent=1 // pred_check
      _
    $region23: #{tpu_custom_call.1} parent=1 // pred_check_branch
      %110 = sbr.rel (0) target = $region25
    $region24: #{tpu_custom_call.1} parent=1 // pred_region
      %111 = dma.done [#allocation5], 16
    $region25: #{tpu_custom_call.1} parent=1 // pred_fallthru
      _
    %112 = sfence
    %113 = vsyncpa [#allocation3], 1
    %114 = vsyncpa [#allocation4], 1
    %115 = vsyncpa [#allocation5], 1

</llo_original>
